<compile_context>
chip_gen: v7x
topology: tpu7x:2x2x1
jax: 0.10.0
libtpu: 0.0.40
codegen_flags: <defaults>
</compile_context>

<pallas_src>
import jax
import jax.numpy as jnp
from jax import lax
from jax.experimental import pallas as pl


# ------------------------------ fused kernel --------------------------------

def _leaky_relu_l2norm(z):
    """LeakyReLU(0.2) followed by row L2-normalize (F.normalize, eps=1e-12)."""
    z = jnp.maximum(z, 0.2 * z)                       # LeakyReLU(0.2)
    ss = jnp.sum(z * z, axis=1, keepdims=True)
    # 1 / max(||z||, 1e-12) == rsqrt(max(||z||^2, 1e-24)); rsqrt -> EUP slot.
    return z * lax.rsqrt(jnp.maximum(ss, 1e-24))


def _make_fused_forward_kernel(layer_dims, slab_width):
    """Whole forward (user SAGE stack + item Linear stack) in one kernel.

    Ref order (grid=()):
      a_mean(bf16), h_user(f32), h_item(f32),
      [w_user_l (d_in, 2*d_out) bf16, b_user_l (1, d_out) f32] * L,
      [w_item_l (d_in,   d_out) bf16, b_item_l (1, d_out) f32] * L,
      user_slab_out (N_user, slab_width) f32,
      item_slab_out (N_item, slab_width) f32
    """
    n_layers = len(layer_dims)

    def kernel(*refs):
        a_ref, hu_ref, hi_ref = refs[0], refs[1], refs[2]
        uref = refs[3:3 + 2 * n_layers]
        iref = refs[3 + 2 * n_layers:3 + 4 * n_layers]
        user_out_ref = refs[3 + 4 * n_layers]
        item_out_ref = refs[4 + 4 * n_layers]

        a_bf = a_ref[...]                              # (Nu, Nu) bf16

        # ---------------- user path: SAGEConv('mean') stack -----------------
        h = hu_ref[...]                                # f32 (Nu, in_size)
        chunks = [h]
        for l, d_out in enumerate(layer_dims):
            w_ref, b_ref = uref[2 * l], uref[2 * l + 1]
            # One MXU pass of H against [W_self | W_neigh] (output-fused),
            # then A applied to the d_out-wide activation (reassociated:
            # A @ (H @ W_neigh) instead of (A @ H) @ W_neigh).
            hw = jnp.dot(h.astype(jnp.bfloat16), w_ref[...],
                         preferred_element_type=jnp.float32)     # (Nu, 2*d_out)
            z_self = hw[:, :d_out]
            z_neigh = jnp.dot(a_bf, hw[:, d_out:].astype(jnp.bfloat16),
                              preferred_element_type=jnp.float32)
            z = z_self + z_neigh + b_ref[...]
            h = _leaky_relu_l2norm(z)
            chunks.append(h)
        pad = slab_width - sum(c.shape[1] for c in chunks)
        if pad > 0:
            chunks.append(jnp.zeros((h.shape[0], pad), jnp.float32))
        # Single lane-dense (multiple-of-128 wide) store of the concat slab.
        user_out_ref[...] = jnp.concatenate(chunks, axis=1)

        # -------------------- item path: Linear stack ------------------------
        h = hi_ref[...]                                # f32 (Ni, in_size)
        chunks = [h]
        for l, d_out in enumerate(layer_dims):
            w_ref, b_ref = iref[2 * l], iref[2 * l + 1]
            z = jnp.dot(h.astype(jnp.bfloat16), w_ref[...],
                        preferred_element_type=jnp.float32) + b_ref[...]
            h = _leaky_relu_l2norm(z)
            chunks.append(h)
        pad = slab_width - sum(c.shape[1] for c in chunks)
        if pad > 0:
            chunks.append(jnp.zeros((h.shape[0], pad), jnp.float32))
        item_out_ref[...] = jnp.concatenate(chunks, axis=1)

    return kernel


def _full_spec(shape):
    # whole-array block, single grid point (grid=()).
    return pl.BlockSpec(shape, lambda: (0,) * len(shape))


def fused_forward(a_mean, h_user, h_item, user_layers, item_layers):
    """Run the whole TwoSideGraphModel embedding stack in one pallas_call.

    user_layers: [(w_self, w_neigh, b)], item_layers: [(w, b)]   (all f32).
    Returns (user_slab, item_slab) f32 (N, slab_width); the first total_dim
    columns are torch.cat([h0, h1, ..., hL], dim=1), the rest are zero pad.
    """
    layer_dims = tuple(w.shape[1] for (w, _) in item_layers)
    in_size = h_user.shape[1]
    total_dim = in_size + sum(layer_dims)
    slab_width = ((total_dim + 127) // 128) * 128          # lane-dense slab
    n_user, n_item = h_user.shape[0], h_item.shape[0]

    # Pre-pack weights: bf16 for the MXU, W_self/W_neigh fused on output axis.
    a_bf = a_mean.astype(jnp.bfloat16)
    packed = []
    for (w_self, w_neigh, b) in user_layers:
        packed.append(jnp.concatenate([w_self, w_neigh], axis=1)
                      .astype(jnp.bfloat16))
        packed.append(b)
    for (w, b) in item_layers:
        packed.append(w.astype(jnp.bfloat16))
        packed.append(b)

    inputs = [a_bf, h_user, h_item] + packed
    kernel = _make_fused_forward_kernel(layer_dims, slab_width)

    user_slab, item_slab = pl.pallas_call(
        kernel,
        out_shape=(jax.ShapeDtypeStruct((n_user, slab_width), jnp.float32),
                   jax.ShapeDtypeStruct((n_item, slab_width), jnp.float32)),
        grid=(),
        in_specs=[_full_spec(x.shape) for x in inputs],
        out_specs=(_full_spec((n_user, slab_width)),
                   _full_spec((n_item, slab_width))),
    )(*inputs)
    return user_slab, item_slab


# ------------------------------ model wrapper --------------------------------

def init_params(key, n_user, n_item, in_size, layer_size):
    """Deterministic synthetic parameters (xavier-uniform style)."""
    ks = jax.random.split(key, 16)
    ki = iter(range(16))

    def xavier(k, shape):
        fan_in, fan_out = shape[0], shape[1]
        a = jnp.sqrt(6.0 / (fan_in + fan_out))
        return jax.random.uniform(k, shape, jnp.float32, -a, a)

    params = {
        "user_feat": xavier(ks[next(ki)], (n_user, in_size)),
        "item_feat": xavier(ks[next(ki)], (n_item, in_size)),
        "user_layers": [],
        "item_layers": [],
    }
    dims = [in_size] + list(layer_size)
    for d_in, d_out in zip(dims[:-1], dims[1:]):
        w_self = xavier(ks[next(ki)], (d_in, d_out))
        w_neigh = xavier(ks[next(ki)], (d_in, d_out))
        b_u = jnp.zeros((1, d_out), jnp.float32)
        params["user_layers"].append((w_self, w_neigh, b_u))
        w = xavier(ks[next(ki)], (d_in, d_out))
        b_i = jnp.zeros((1, d_out), jnp.float32)
        params["item_layers"].append((w, b_i))
    return params


def make_mean_adjacency(key, n_nodes, edge_prob=0.2):
    """Dense row-normalized adjacency (== DGL 'mean' aggregation matrix)."""
    adj = (jax.random.uniform(key, (n_nodes, n_nodes)) < edge_prob)
    adj = adj.astype(jnp.float32)
    deg = jnp.sum(adj, axis=1, keepdims=True)
    return adj / jnp.maximum(deg, 1.0)


def two_side_graph_forward(params, a_user, users, pos_items, neg_items):
    # TODO(synk): dropout is treated as identity (inference mode).
    user_slab, item_slab = fused_forward(
        a_user, params["user_feat"], params["item_feat"],
        params["user_layers"], params["item_layers"])
    in_size = params["user_feat"].shape[1]
    total_dim = in_size + sum(w.shape[1] for (w, _) in params["item_layers"])
    # Batch row gather + un-pad of the slab is plain-JAX glue (tiny batch).
    u_g = user_slab[users, :total_dim]
    pos_i = item_slab[pos_items, :total_dim]
    neg_i = item_slab[neg_items, :total_dim]
    return u_g, pos_i, neg_i


def reference_forward(params, a_user, users, pos_items, neg_items):
    """Pure-JAX f32 reference of the PyTorch semantics (for validation)."""
    h_user = params["user_feat"]
    h_item = params["item_feat"]
    ue, ie = [h_user], [h_item]
    for (w_self, w_neigh, b) in params["user_layers"]:
        z = h_user @ w_self + (a_user @ h_user) @ w_neigh + b
        z = jnp.where(z > 0, z, 0.2 * z)
        h_user = z / jnp.maximum(
            jnp.linalg.norm(z, axis=1, keepdims=True), 1e-12)
        ue.append(h_user)
    for (w, b) in params["item_layers"]:
        z = h_item @ w + b
        z = jnp.where(z > 0, z, 0.2 * z)
        h_item = z / jnp.maximum(
            jnp.linalg.norm(z, axis=1, keepdims=True), 1e-12)
        ie.append(h_item)
    ue = jnp.concatenate(ue, axis=1)
    ie = jnp.concatenate(ie, axis=1)
    return ue[users, :], ie[pos_items, :], ie[neg_items, :]


# ----------------------------------- main ------------------------------------

if __name__ == "__main__":
    key = jax.random.PRNGKey(0)
    k_param, k_graph, k_u, k_p, k_n = jax.random.split(key, 5)

    N_USER, N_ITEM = 64, 64
    IN_SIZE = 32
    LAYER_SIZE = [32, 16]
    BATCH = 8

    params = init_params(k_param, N_USER, N_ITEM, IN_SIZE, LAYER_SIZE)
    a_user = make_mean_adjacency(k_graph, N_USER, edge_prob=0.2)

    users = jax.random.randint(k_u, (BATCH,), 0, N_USER)
    pos_items = jax.random.randint(k_p, (BATCH,), 0, N_ITEM)
    neg_items = jax.random.randint(k_n, (BATCH,), 0, N_ITEM)

    fwd = jax.jit(two_side_graph_forward)
    u_g, pos_i, neg_i = fwd(params, a_user, users, pos_items, neg_items)
    jax.block_until_ready((u_g, pos_i, neg_i))

    total_dim = IN_SIZE + sum(LAYER_SIZE)
    assert u_g.shape == (BATCH, total_dim)
    assert pos_i.shape == (BATCH, total_dim)
    assert neg_i.shape == (BATCH, total_dim)

    # Validate against the f32 pure-JAX reference (loose tol: bf16 MXU inputs).
    u_r, p_r, n_r = reference_forward(params, a_user, users, pos_items,
                                      neg_items)
    err = max(float(jnp.max(jnp.abs(u_g - u_r))),
              float(jnp.max(jnp.abs(pos_i - p_r))),
              float(jnp.max(jnp.abs(neg_i - n_r))))
    assert err < 0.05, f"max abs error vs f32 reference too large: {err}"

    print("KERNEL_OK")
</pallas_src>

<mosaic_0001>
module attributes {stable_mosaic.version = 11 : i64} {
  func.func @kernel(%arg0: memref<64x64xbf16, #tpu.memory_space<vmem>>, %arg1: memref<64x32xf32, #tpu.memory_space<vmem>>, %arg2: memref<64x32xf32, #tpu.memory_space<vmem>>, %arg3: memref<32x64xbf16, #tpu.memory_space<vmem>>, %arg4: memref<1x32xf32, #tpu.memory_space<vmem>>, %arg5: memref<32x32xbf16, #tpu.memory_space<vmem>>, %arg6: memref<1x16xf32, #tpu.memory_space<vmem>>, %arg7: memref<32x32xbf16, #tpu.memory_space<vmem>>, %arg8: memref<1x32xf32, #tpu.memory_space<vmem>>, %arg9: memref<32x16xbf16, #tpu.memory_space<vmem>>, %arg10: memref<1x16xf32, #tpu.memory_space<vmem>>, %arg11: memref<64x128xf32, #tpu.memory_space<vmem>>, %arg12: memref<64x128xf32, #tpu.memory_space<vmem>>) attributes {dimension_semantics = [], scalar_prefetch = 0 : i64, scratch_operands = 0 : i64, tpu.core_type = #tpu.core_type<tc>} {
    %c0 = arith.constant 0 : index
    %c0_0 = arith.constant 0 : index
    %0 = vector.load %arg0[%c0, %c0_0] : memref<64x64xbf16, #tpu.memory_space<vmem>>, vector<64x64xbf16>
    %c0_1 = arith.constant 0 : index
    %c0_2 = arith.constant 0 : index
    %1 = vector.load %arg1[%c0_1, %c0_2] : memref<64x32xf32, #tpu.memory_space<vmem>>, vector<64x32xf32>
    %2 = arith.truncf %1 : vector<64x32xf32> to vector<64x32xbf16>
    %c0_3 = arith.constant 0 : index
    %c0_4 = arith.constant 0 : index
    %3 = vector.load %arg3[%c0_3, %c0_4] : memref<32x64xbf16, #tpu.memory_space<vmem>>, vector<32x64xbf16>
    %cst = arith.constant dense<0.000000e+00> : vector<64x64xf32>
    %4 = tpu.matmul %2, %3, %cst {dimension_numbers = #tpu.dot_dimension_numbers<[1], [0], [0], [1], [0, 0, 1, 1], [], []>} : vector<64x32xbf16>, vector<32x64xbf16>, vector<64x64xf32> -> vector<64x64xf32>
    %5 = vector.extract_strided_slice %4 {offsets = [0, 0], sizes = [64, 32], strides = [1, 1]} : vector<64x64xf32> to vector<64x32xf32>
    %6 = vector.extract_strided_slice %4 {offsets = [0, 32], sizes = [64, 32], strides = [1, 1]} : vector<64x64xf32> to vector<64x32xf32>
    %7 = arith.truncf %6 : vector<64x32xf32> to vector<64x32xbf16>
    %cst_5 = arith.constant dense<0.000000e+00> : vector<64x32xf32>
    %8 = tpu.matmul %0, %7, %cst_5 {dimension_numbers = #tpu.dot_dimension_numbers<[1], [0], [0], [1], [0, 0, 1, 1], [], []>} : vector<64x64xbf16>, vector<64x32xbf16>, vector<64x32xf32> -> vector<64x32xf32>
    %9 = arith.addf %5, %8 : vector<64x32xf32>
    %c0_6 = arith.constant 0 : index
    %c0_7 = arith.constant 0 : index
    %10 = vector.load %arg4[%c0_6, %c0_7] : memref<1x32xf32, #tpu.memory_space<vmem>>, vector<1x32xf32>
    %11 = vector.broadcast %10 : vector<1x32xf32> to vector<64x32xf32>
    %12 = arith.addf %9, %11 : vector<64x32xf32>
    %cst_8 = arith.constant 2.000000e-01 : f32
    %13 = vector.broadcast %cst_8 : f32 to vector<64x32xf32>
    %14 = arith.mulf %13, %12 : vector<64x32xf32>
    %15 = arith.maximumf %12, %14 : vector<64x32xf32>
    %16 = arith.mulf %15, %15 : vector<64x32xf32>
    %cst_9 = arith.constant dense<0.000000e+00> : vector<64xf32>
    %17 = vector.multi_reduction <add>, %16, %cst_9 [1] : vector<64x32xf32> to vector<64xf32>
    %18 = vector.shape_cast %17 : vector<64xf32> to vector<64x1xf32>
    %cst_10 = arith.constant 1.000000e-24 : f32
    %19 = vector.broadcast %cst_10 : f32 to vector<64x1xf32>
    %20 = arith.maximumf %18, %19 : vector<64x1xf32>
    %21 = math.rsqrt %20 : vector<64x1xf32>
    %22 = vector.broadcast %21 : vector<64x1xf32> to vector<64x32xf32>
    %23 = arith.mulf %15, %22 : vector<64x32xf32>
    %24 = arith.truncf %23 : vector<64x32xf32> to vector<64x32xbf16>
    %c0_11 = arith.constant 0 : index
    %c0_12 = arith.constant 0 : index
    %25 = vector.load %arg5[%c0_11, %c0_12] : memref<32x32xbf16, #tpu.memory_space<vmem>>, vector<32x32xbf16>
    %cst_13 = arith.constant dense<0.000000e+00> : vector<64x32xf32>
    %26 = tpu.matmul %24, %25, %cst_13 {dimension_numbers = #tpu.dot_dimension_numbers<[1], [0], [0], [1], [0, 0, 1, 1], [], []>} : vector<64x32xbf16>, vector<32x32xbf16>, vector<64x32xf32> -> vector<64x32xf32>
    %27 = vector.extract_strided_slice %26 {offsets = [0, 0], sizes = [64, 16], strides = [1, 1]} : vector<64x32xf32> to vector<64x16xf32>
    %28 = vector.extract_strided_slice %26 {offsets = [0, 16], sizes = [64, 16], strides = [1, 1]} : vector<64x32xf32> to vector<64x16xf32>
    %29 = arith.truncf %28 : vector<64x16xf32> to vector<64x16xbf16>
    %cst_14 = arith.constant dense<0.000000e+00> : vector<64x16xf32>
    %30 = tpu.matmul %0, %29, %cst_14 {dimension_numbers = #tpu.dot_dimension_numbers<[1], [0], [0], [1], [0, 0, 1, 1], [], []>} : vector<64x64xbf16>, vector<64x16xbf16>, vector<64x16xf32> -> vector<64x16xf32>
    %31 = arith.addf %27, %30 : vector<64x16xf32>
    %c0_15 = arith.constant 0 : index
    %c0_16 = arith.constant 0 : index
    %32 = vector.load %arg6[%c0_15, %c0_16] : memref<1x16xf32, #tpu.memory_space<vmem>>, vector<1x16xf32>
    %33 = vector.broadcast %32 : vector<1x16xf32> to vector<64x16xf32>
    %34 = arith.addf %31, %33 : vector<64x16xf32>
    %cst_17 = arith.constant 2.000000e-01 : f32
    %35 = vector.broadcast %cst_17 : f32 to vector<64x16xf32>
    %36 = arith.mulf %35, %34 : vector<64x16xf32>
    %37 = arith.maximumf %34, %36 : vector<64x16xf32>
    %38 = arith.mulf %37, %37 : vector<64x16xf32>
    %cst_18 = arith.constant dense<0.000000e+00> : vector<64xf32>
    %39 = vector.multi_reduction <add>, %38, %cst_18 [1] : vector<64x16xf32> to vector<64xf32>
    %40 = vector.shape_cast %39 : vector<64xf32> to vector<64x1xf32>
    %cst_19 = arith.constant 1.000000e-24 : f32
    %41 = vector.broadcast %cst_19 : f32 to vector<64x1xf32>
    %42 = arith.maximumf %40, %41 : vector<64x1xf32>
    %43 = math.rsqrt %42 : vector<64x1xf32>
    %44 = vector.broadcast %43 : vector<64x1xf32> to vector<64x16xf32>
    %45 = arith.mulf %37, %44 : vector<64x16xf32>
    %cst_20 = arith.constant 0.000000e+00 : f32
    %46 = vector.broadcast %cst_20 : f32 to vector<64x48xf32>
    %47 = tpu.concatenate %1, %23, %45, %46 in 1 : vector<64x32xf32>, vector<64x32xf32>, vector<64x16xf32>, vector<64x48xf32> -> vector<64x128xf32>
    %c0_21 = arith.constant 0 : index
    %c0_22 = arith.constant 0 : index
    %48 = vector.load %arg11[%c0_21, %c0_22] : memref<64x128xf32, #tpu.memory_space<vmem>>, vector<64x128xf32>
    tpu.vector_store %arg11[%c0_21, %c0_22], %47 {strides = array<i32>} : memref<64x128xf32, #tpu.memory_space<vmem>>, vector<64x128xf32>,
    %c0_23 = arith.constant 0 : index
    %c0_24 = arith.constant 0 : index
    %49 = vector.load %arg2[%c0_23, %c0_24] : memref<64x32xf32, #tpu.memory_space<vmem>>, vector<64x32xf32>
    %50 = arith.truncf %49 : vector<64x32xf32> to vector<64x32xbf16>
    %c0_25 = arith.constant 0 : index
    %c0_26 = arith.constant 0 : index
    %51 = vector.load %arg7[%c0_25, %c0_26] : memref<32x32xbf16, #tpu.memory_space<vmem>>, vector<32x32xbf16>
    %cst_27 = arith.constant dense<0.000000e+00> : vector<64x32xf32>
    %52 = tpu.matmul %50, %51, %cst_27 {dimension_numbers = #tpu.dot_dimension_numbers<[1], [0], [0], [1], [0, 0, 1, 1], [], []>} : vector<64x32xbf16>, vector<32x32xbf16>, vector<64x32xf32> -> vector<64x32xf32>
    %c0_28 = arith.constant 0 : index
    %c0_29 = arith.constant 0 : index
    %53 = vector.load %arg8[%c0_28, %c0_29] : memref<1x32xf32, #tpu.memory_space<vmem>>, vector<1x32xf32>
    %54 = vector.broadcast %53 : vector<1x32xf32> to vector<64x32xf32>
    %55 = arith.addf %52, %54 : vector<64x32xf32>
    %cst_30 = arith.constant 2.000000e-01 : f32
    %56 = vector.broadcast %cst_30 : f32 to vector<64x32xf32>
    %57 = arith.mulf %56, %55 : vector<64x32xf32>
    %58 = arith.maximumf %55, %57 : vector<64x32xf32>
    %59 = arith.mulf %58, %58 : vector<64x32xf32>
    %cst_31 = arith.constant dense<0.000000e+00> : vector<64xf32>
    %60 = vector.multi_reduction <add>, %59, %cst_31 [1] : vector<64x32xf32> to vector<64xf32>
    %61 = vector.shape_cast %60 : vector<64xf32> to vector<64x1xf32>
    %cst_32 = arith.constant 1.000000e-24 : f32
    %62 = vector.broadcast %cst_32 : f32 to vector<64x1xf32>
    %63 = arith.maximumf %61, %62 : vector<64x1xf32>
    %64 = math.rsqrt %63 : vector<64x1xf32>
    %65 = vector.broadcast %64 : vector<64x1xf32> to vector<64x32xf32>
    %66 = arith.mulf %58, %65 : vector<64x32xf32>
    %67 = arith.truncf %66 : vector<64x32xf32> to vector<64x32xbf16>
    %c0_33 = arith.constant 0 : index
    %c0_34 = arith.constant 0 : index
    %68 = vector.load %arg9[%c0_33, %c0_34] : memref<32x16xbf16, #tpu.memory_space<vmem>>, vector<32x16xbf16>
    %cst_35 = arith.constant dense<0.000000e+00> : vector<64x16xf32>
    %69 = tpu.matmul %67, %68, %cst_35 {dimension_numbers = #tpu.dot_dimension_numbers<[1], [0], [0], [1], [0, 0, 1, 1], [], []>} : vector<64x32xbf16>, vector<32x16xbf16>, vector<64x16xf32> -> vector<64x16xf32>
    %c0_36 = arith.constant 0 : index
    %c0_37 = arith.constant 0 : index
    %70 = vector.load %arg10[%c0_36, %c0_37] : memref<1x16xf32, #tpu.memory_space<vmem>>, vector<1x16xf32>
    %71 = vector.broadcast %70 : vector<1x16xf32> to vector<64x16xf32>
    %72 = arith.addf %69, %71 : vector<64x16xf32>
    %cst_38 = arith.constant 2.000000e-01 : f32
    %73 = vector.broadcast %cst_38 : f32 to vector<64x16xf32>
    %74 = arith.mulf %73, %72 : vector<64x16xf32>
    %75 = arith.maximumf %72, %74 : vector<64x16xf32>
    %76 = arith.mulf %75, %75 : vector<64x16xf32>
    %cst_39 = arith.constant dense<0.000000e+00> : vector<64xf32>
    %77 = vector.multi_reduction <add>, %76, %cst_39 [1] : vector<64x16xf32> to vector<64xf32>
    %78 = vector.shape_cast %77 : vector<64xf32> to vector<64x1xf32>
    %cst_40 = arith.constant 1.000000e-24 : f32
    %79 = vector.broadcast %cst_40 : f32 to vector<64x1xf32>
    %80 = arith.maximumf %78, %79 : vector<64x1xf32>
    %81 = math.rsqrt %80 : vector<64x1xf32>
    %82 = vector.broadcast %81 : vector<64x1xf32> to vector<64x16xf32>
    %83 = arith.mulf %75, %82 : vector<64x16xf32>
    %cst_41 = arith.constant 0.000000e+00 : f32
    %84 = vector.broadcast %cst_41 : f32 to vector<64x48xf32>
    %85 = tpu.concatenate %49, %66, %83, %84 in 1 : vector<64x32xf32>, vector<64x32xf32>, vector<64x16xf32>, vector<64x48xf32> -> vector<64x128xf32>
    %c0_42 = arith.constant 0 : index
    %c0_43 = arith.constant 0 : index
    %86 = vector.load %arg12[%c0_42, %c0_43] : memref<64x128xf32, #tpu.memory_space<vmem>>, vector<64x128xf32>
    tpu.vector_store %arg12[%c0_42, %c0_43], %85 {strides = array<i32>} : memref<64x128xf32, #tpu.memory_space<vmem>>, vector<64x128xf32>,
    return
  }
}

</mosaic_0001>

<llo_original>
// kernel: two_side_graph_forward.1
$region0: #{two_side_graph_forward.1}
  #allocation0 [shape = 'u32[]', space=smem, size = 0x4, offset = 0x4, fixed_abs, tag = 'smem constant byte address 0x4 - core index']
  #allocation1 [shape = 'u32[144,128]{1,0:T(1,128)}', space=vmem, size = 0x12000, scoped, tag = 'internal scratch']
  %s0 = inlined_call_operand.vmem [shape: bf16[64,64], index: 0, kind: input, shape index: {}]
  %s1 = inlined_call_operand.vmem [shape: f32[64,32], index: 1, kind: input, shape index: {}]
  %s2 = inlined_call_operand.vmem [shape: f32[64,32], index: 2, kind: input, shape index: {}]
  %s3 = inlined_call_operand.vmem [shape: bf16[32,64], index: 3, kind: input, shape index: {}]
  %s4 = inlined_call_operand.vmem [shape: f32[1,32], index: 4, kind: input, shape index: {}]
  %s5 = inlined_call_operand.vmem [shape: bf16[32,32], index: 5, kind: input, shape index: {}]
  %s6 = inlined_call_operand.vmem [shape: f32[1,16], index: 6, kind: input, shape index: {}]
  %s7 = inlined_call_operand.vmem [shape: bf16[32,32], index: 7, kind: input, shape index: {}]
  %s8 = inlined_call_operand.vmem [shape: f32[1,32], index: 8, kind: input, shape index: {}]
  %s9 = inlined_call_operand.vmem [shape: bf16[32,16], index: 9, kind: input, shape index: {}]
  %s10 = inlined_call_operand.vmem [shape: f32[1,16], index: 10, kind: input, shape index: {}]
  %s11 = inlined_call_operand.vmem [shape: f32[64,128], index: 11, kind: output, shape index: {0}]
  %s12 = inlined_call_operand.vmem [shape: f32[64,128], index: 12, kind: output, shape index: {1}]
  %13 = xla_tuple %s11, %s12
  %s14 = sld [smem:[#allocation0]]
  $region62: #{two_side_graph_forward.1} parent=0
    _
  %s16 = ssub.s32 1, %s14
  %s17 = scalar_select 0, %s16, %s14
  // Predicated region
  $region2: #{two_side_graph_forward.1} parent=0 // pred_check
    _
  $region3: #{two_side_graph_forward.1} parent=0 // pred_check_branch
    %19 = sbr.rel (0) target = $region5
  $region4: #{two_side_graph_forward.1} parent=0 // pred_region
    _
  $region5: #{two_side_graph_forward.1} parent=0 // pred_fallthru
    _
  // Predicated region
  $region6: #{two_side_graph_forward.1} parent=0 // pred_check
    _
  $region7: #{two_side_graph_forward.1} parent=0 // pred_check_branch
    %21 = sbr.rel (0) target = $region9
  $region8: #{two_side_graph_forward.1} parent=0 // pred_region
    _
  $region9: #{two_side_graph_forward.1} parent=0 // pred_fallthru
    _
  // Predicated region
  $region10: #{two_side_graph_forward.1} parent=0 // pred_check
    _
  $region11: #{two_side_graph_forward.1} parent=0 // pred_check_branch
    %23 = sbr.rel (0) target = $region13
  $region12: #{two_side_graph_forward.1} parent=0 // pred_region
    _
  $region13: #{two_side_graph_forward.1} parent=0 // pred_fallthru
    _
  // Predicated region
  $region14: #{two_side_graph_forward.1} parent=0 // pred_check
    _
  $region15: #{two_side_graph_forward.1} parent=0 // pred_check_branch
    %25 = sbr.rel (0) target = $region17
  $region16: #{two_side_graph_forward.1} parent=0 // pred_region
    _
  $region17: #{two_side_graph_forward.1} parent=0 // pred_fallthru
    _
  // Predicated region
  $region18: #{two_side_graph_forward.1} parent=0 // pred_check
    _
  $region19: #{two_side_graph_forward.1} parent=0 // pred_check_branch
    %27 = sbr.rel (0) target = $region21
  $region20: #{two_side_graph_forward.1} parent=0 // pred_region
    _
  $region21: #{two_side_graph_forward.1} parent=0 // pred_fallthru
    _
  // Predicated region
  $region22: #{two_side_graph_forward.1} parent=0 // pred_check
    _
  $region23: #{two_side_graph_forward.1} parent=0 // pred_check_branch
    %29 = sbr.rel (0) target = $region25
  $region24: #{two_side_graph_forward.1} parent=0 // pred_region
    _
  $region25: #{two_side_graph_forward.1} parent=0 // pred_fallthru
    _
  // Predicated region
  $region26: #{two_side_graph_forward.1} parent=0 // pred_check
    _
  $region27: #{two_side_graph_forward.1} parent=0 // pred_check_branch
    %31 = sbr.rel (0) target = $region29
  $region28: #{two_side_graph_forward.1} parent=0 // pred_region
    _
  $region29: #{two_side_graph_forward.1} parent=0 // pred_fallthru
    _
  // Predicated region
  $region30: #{two_side_graph_forward.1} parent=0 // pred_check
    _
  $region31: #{two_side_graph_forward.1} parent=0 // pred_check_branch
    %33 = sbr.rel (0) target = $region33
  $region32: #{two_side_graph_forward.1} parent=0 // pred_region
    _
  $region33: #{two_side_graph_forward.1} parent=0 // pred_fallthru
    _
  // Predicated region
  $region34: #{two_side_graph_forward.1} parent=0 // pred_check
    _
  $region35: #{two_side_graph_forward.1} parent=0 // pred_check_branch
    %35 = sbr.rel (0) target = $region37
  $region36: #{two_side_graph_forward.1} parent=0 // pred_region
    _
  $region37: #{two_side_graph_forward.1} parent=0 // pred_fallthru
    _
  // Predicated region
  $region38: #{two_side_graph_forward.1} parent=0 // pred_check
    _
  $region39: #{two_side_graph_forward.1} parent=0 // pred_check_branch
    %37 = sbr.rel (0) target = $region41
  $region40: #{two_side_graph_forward.1} parent=0 // pred_region
    _
  $region41: #{two_side_graph_forward.1} parent=0 // pred_fallthru
    _
  // Predicated region
  $region42: #{two_side_graph_forward.1} parent=0 // pred_check
    _
  $region43: #{two_side_graph_forward.1} parent=0 // pred_check_branch
    %39 = sbr.rel (0) target = $region45
  $region44: #{two_side_graph_forward.1} parent=0 // pred_region
    _
  $region45: #{two_side_graph_forward.1} parent=0 // pred_fallthru
    _
  %v41 = vld [vmem:[%s0] sm:$0xf]
  %v42 = vld [vmem:[%s0 + $0x4] sm:$0xf]
  %v43 = vld [vmem:[%s0 + $0x8] sm:$0xf]
  %v44 = vld [vmem:[%s0 + $0xc] sm:$0xf]
  %v45 = vld [vmem:[%s0 + $0x10] sm:$0xf]
  %v46 = vld [vmem:[%s0 + $0x14] sm:$0xf]
  %v47 = vld [vmem:[%s0 + $0x18] sm:$0xf]
  %v48 = vld [vmem:[%s0 + $0x1c] sm:$0xf]
  %v49 = vld [vmem:[%s1] sm:$0xff]
  %v50 = vld [vmem:[%s1 + $0x8] sm:$0xff]
  %v51 = vld [vmem:[%s1 + $0x10] sm:$0xff]
  %v52 = vld [vmem:[%s1 + $0x18] sm:$0xff]
  %v53 = vld [vmem:[%s1 + $0x20] sm:$0xff]
  %v54 = vld [vmem:[%s1 + $0x28] sm:$0xff]
  %v55 = vld [vmem:[%s1 + $0x30] sm:$0xff]
  %v56 = vld [vmem:[%s1 + $0x38] sm:$0xff]
  %v57 = vpack.c.bf16 %v50, %v49
  %v58 = vpack.c.bf16 %v52, %v51
  %v59 = vpack.c.bf16 %v54, %v53
  %v60 = vpack.c.bf16 %v56, %v55
  %v61 = vld [vmem:[%s3] sm:$0xf]
  %v62 = vld [vmem:[%s3 + $0x4] sm:$0xf]
  %v63 = vld [vmem:[%s3 + $0x8] sm:$0xf]
  %v64 = vld [vmem:[%s3 + $0xc] sm:$0xf]
  %v69 = vunpack.c.l.b16 %v61
  %v70 = vunpack.c.l.b16 %v62
  %v71 = vunpack.c.l.b16 %v63
  %v72 = vunpack.c.l.b16 %v64
  %v73 = vpack.c.b16 %v70, %v69
  %v74 = vpack.c.b16 %v72, %v71
  %vm77 = vcmask 261120
  %v79 = vsel %vm77, %v57, 0
  %v82 = vsel %vm77, %v58, 0
  %v85 = vsel %vm77, %v59, 0
  %v88 = vsel %vm77, %v60, 0
  %90 = vmatprep.subr.bf16.mxu0 0
  %91 = vmatpush1.bf16.msra.mxu0 %v73
  %92 = vmatprep.subr.bf16.mxu0 0
  %93 = vmatpush1.bf16.msra.mxu0 %v74
  %94 = vmatprep.subr.bf16.mxu0 0
  %95 = vmatpush1.bf16.msra.mxu0 0
  %96 = vmatprep.subr.bf16.mxu0 0
  %97 = vmatpush1.bf16.msra.mxu0 0
  %98 = vmatprep.subr.bf16.mxu0 0
  %99 = vmatpush1.bf16.msra.mxu0 0
  %100 = vmatprep.subr.bf16.mxu0 0
  %101 = vmatpush1.bf16.msra.mxu0 0
  %102 = vmatprep.subr.bf16.mxu0 0
  %103 = vmatpush1.bf16.msra.mxu0 0
  %104 = vmatprep.subr.bf16.mxu0 0
  %105 = vmatpush1.bf16.msra.mxu0 0
  %106 = vmatprep.subr.bf16.mxu0 0
  %107 = vmatpush1.bf16.msra.mxu0 0
  %108 = vmatprep.subr.bf16.mxu0 0
  %109 = vmatpush1.bf16.msra.mxu0 0
  %110 = vmatprep.subr.bf16.mxu0 0
  %111 = vmatpush1.bf16.msra.mxu0 0
  %112 = vmatprep.subr.bf16.mxu0 0
  %113 = vmatpush1.bf16.msra.mxu0 0
  %114 = vmatprep.subr.bf16.mxu0 0
  %115 = vmatpush1.bf16.msra.mxu0 0
  %116 = vmatprep.subr.bf16.mxu0 0
  %117 = vmatpush1.bf16.msra.mxu0 0
  %118 = vmatprep.subr.bf16.mxu0 0
  %119 = vmatpush1.bf16.msra.mxu0 0
  %120 = vmatprep.subr.bf16.mxu0 0
  %121 = vmatpush1.bf16.msra.mxu0 0
  %122 = vmatprep.mubr.bf16.mxu0 0
  %123 = vmatmul.mubr.bf16.gmra.mrb[0].mxu0 %v79
  %v124 = vpop.f32.mrb[0].mxu0
  %v125 = vadd.f32 0.0, %v124
  %v126 = vpop.f32.mrb[0].mxu0
  %v127 = vpop.f32.mrb[0].mxu0
  %v128 = vadd.f32 0.0, %v127
  %v129 = vpop.f32.mrb[0].mxu0
  %130 = vmatprep.mubr.bf16.mxu0 0
  %131 = vmatmul.mubr.bf16.gmra.mrb[0].mxu0 %v82
  %v132 = vpop.f32.mrb[0].mxu0
  %v133 = vadd.f32 0.0, %v132
  %v134 = vpop.f32.mrb[0].mxu0
  %v135 = vpop.f32.mrb[0].mxu0
  %v136 = vadd.f32 0.0, %v135
  %v137 = vpop.f32.mrb[0].mxu0
  %138 = vmatprep.mubr.bf16.mxu0 0
  %139 = vmatmul.mubr.bf16.gmra.mrb[0].mxu0 %v85
  %v140 = vpop.f32.mrb[0].mxu0
  %v141 = vadd.f32 0.0, %v140
  %v142 = vpop.f32.mrb[0].mxu0
  %v143 = vpop.f32.mrb[0].mxu0
  %v144 = vadd.f32 0.0, %v143
  %v145 = vpop.f32.mrb[0].mxu0
  %146 = vmatprep.mubr.bf16.mxu0 0
  %147 = vmatmul.mubr.bf16.gmra.mrb[0].mxu0 %v88
  %v148 = vpop.f32.mrb[0].mxu0
  %v149 = vadd.f32 0.0, %v148
  %v150 = vpop.f32.mrb[0].mxu0
  %v151 = vpop.f32.mrb[0].mxu0
  %v152 = vadd.f32 0.0, %v151
  %v153 = vpop.f32.mrb[0].mxu0
  %154 = vdwg.mxu0
  %v155 = vpack.c.bf16 %v128, %v125
  %v156 = vpack.c.bf16 %v136, %v133
  %v157 = vpack.c.bf16 %v144, %v141
  %v158 = vpack.c.bf16 %v152, %v149
  %v167 = vunpack.c.l.b16 %v41
  %v168 = vunpack.c.l.b16 %v42
  %v169 = vunpack.c.l.b16 %v43
  %v170 = vunpack.c.l.b16 %v44
  %v171 = vunpack.c.l.b16 %v45
  %v172 = vunpack.c.l.b16 %v46
  %v173 = vunpack.c.l.b16 %v47
  %v174 = vunpack.c.l.b16 %v48
  %v175 = vpack.c.b16 %v168, %v167
  %v176 = vpack.c.b16 %v170, %v169
  %v177 = vpack.c.b16 %v172, %v171
  %v178 = vpack.c.b16 %v174, %v173
  %183 = vrot.lane.b32.xlu0 %v155, 96
  %v184 = vpop.permute.xlu0 %183
  %185 = vrot.lane.b32.xlu0 %v156, 96
  %v186 = vpop.permute.xlu0 %185
  %187 = vrot.lane.b32.xlu0 %v157, 96
  %v188 = vpop.permute.xlu0 %187
  %189 = vrot.lane.b32.xlu0 %v158, 96
  %v190 = vpop.permute.xlu0 %189
  %vm195 = vcmask 523264
  %v197 = vsel %vm195, %v175, 0
  %v200 = vsel %vm195, %v176, 0
  %v203 = vsel %vm195, %v177, 0
  %v206 = vsel %vm195, %v178, 0
  %208 = vmatprep.subr.bf16.mxu0 0
  %209 = vmatpush1.bf16.msra.mxu0 %v184
  %210 = vmatprep.subr.bf16.mxu0 0
  %211 = vmatpush1.bf16.msra.mxu0 %v186
  %212 = vmatprep.subr.bf16.mxu0 0
  %213 = vmatpush1.bf16.msra.mxu0 %v188
  %214 = vmatprep.subr.bf16.mxu0 0
  %215 = vmatpush1.bf16.msra.mxu0 %v190
  %216 = vmatprep.subr.bf16.mxu0 0
  %217 = vmatpush1.bf16.msra.mxu0 0
  %218 = vmatprep.subr.bf16.mxu0 0
  %219 = vmatpush1.bf16.msra.mxu0 0
  %220 = vmatprep.subr.bf16.mxu0 0
  %221 = vmatpush1.bf16.msra.mxu0 0
  %222 = vmatprep.subr.bf16.mxu0 0
  %223 = vmatpush1.bf16.msra.mxu0 0
  %224 = vmatprep.subr.bf16.mxu0 0
  %225 = vmatpush1.bf16.msra.mxu0 0
  %226 = vmatprep.subr.bf16.mxu0 0
  %227 = vmatpush1.bf16.msra.mxu0 0
  %228 = vmatprep.subr.bf16.mxu0 0
  %229 = vmatpush1.bf16.msra.mxu0 0
  %230 = vmatprep.subr.bf16.mxu0 0
  %231 = vmatpush1.bf16.msra.mxu0 0
  %232 = vmatprep.subr.bf16.mxu0 0
  %233 = vmatpush1.bf16.msra.mxu0 0
  %234 = vmatprep.subr.bf16.mxu0 0
  %235 = vmatpush1.bf16.msra.mxu0 0
  %236 = vmatprep.subr.bf16.mxu0 0
  %237 = vmatpush1.bf16.msra.mxu0 0
  %238 = vmatprep.subr.bf16.mxu0 0
  %239 = vmatpush1.bf16.msra.mxu0 0
  %240 = vmatprep.mubr.bf16.mxu0 0
  %241 = vmatmul.mubr.bf16.gmra.mrb[0].mxu0 %v197
  %v242 = vpop.f32.mrb[0].mxu0
  %v243 = vadd.f32 0.0, %v242
  %v244 = vpop.f32.mrb[0].mxu0
  %v245 = vpop.f32.mrb[0].mxu0
  %v246 = vadd.f32 0.0, %v245
  %v247 = vpop.f32.mrb[0].mxu0
  %248 = vmatprep.mubr.bf16.mxu0 0
  %249 = vmatmul.mubr.bf16.gmra.mrb[0].mxu0 %v200
  %v250 = vpop.f32.mrb[0].mxu0
  %v251 = vadd.f32 0.0, %v250
  %v252 = vpop.f32.mrb[0].mxu0
  %v253 = vpop.f32.mrb[0].mxu0
  %v254 = vadd.f32 0.0, %v253
  %v255 = vpop.f32.mrb[0].mxu0
  %256 = vmatprep.mubr.bf16.mxu0 0
  %257 = vmatmul.mubr.bf16.gmra.mrb[0].mxu0 %v203
  %v258 = vpop.f32.mrb[0].mxu0
  %v259 = vadd.f32 0.0, %v258
  %v260 = vpop.f32.mrb[0].mxu0
  %v261 = vpop.f32.mrb[0].mxu0
  %v262 = vadd.f32 0.0, %v261
  %v263 = vpop.f32.mrb[0].mxu0
  %264 = vmatprep.mubr.bf16.mxu0 0
  %265 = vmatmul.mubr.bf16.gmra.mrb[0].mxu0 %v206
  %v266 = vpop.f32.mrb[0].mxu0
  %v267 = vadd.f32 0.0, %v266
  %v268 = vpop.f32.mrb[0].mxu0
  %v269 = vpop.f32.mrb[0].mxu0
  %v270 = vadd.f32 0.0, %v269
  %v271 = vpop.f32.mrb[0].mxu0
  %272 = vdwg.mxu0
  %v273 = vadd.f32 %v125, %v243
  %v274 = vadd.f32 %v128, %v246
  %v275 = vadd.f32 %v133, %v251
  %v276 = vadd.f32 %v136, %v254
  %v277 = vadd.f32 %v141, %v259
  %v278 = vadd.f32 %v144, %v262
  %v279 = vadd.f32 %v149, %v267
  %v280 = vadd.f32 %v152, %v270
  %v281 = vld [vmem:[%s4] sm:$0x1]
  %v283 = vlaneseq
  %v284 = vshrl.u32 %v283, 7
  %v285 = vsub.s32 0, %v284
  %v286 = vrot.slane %v281, %v285
  %v288 = vadd.f32 %v273, %v286
  %v289 = vadd.f32 %v274, %v286
  %v290 = vadd.f32 %v275, %v286
  %v291 = vadd.f32 %v276, %v286
  %v292 = vadd.f32 %v277, %v286
  %v293 = vadd.f32 %v278, %v286
  %v294 = vadd.f32 %v279, %v286
  %v295 = vadd.f32 %v280, %v286
  %v296 = vmul.f32 %v288, 0.2
  %v297 = vmul.f32 %v289, 0.2
  %v298 = vmul.f32 %v290, 0.2
  %v299 = vmul.f32 %v291, 0.2
  %v300 = vmul.f32 %v292, 0.2
  %v301 = vmul.f32 %v293, 0.2
  %v302 = vmul.f32 %v294, 0.2
  %v303 = vmul.f32 %v295, 0.2
  %v304 = vmax.f32 %v288, %v296
  %v305 = vmax.f32 %v289, %v297
  %v306 = vmax.f32 %v290, %v298
  %v307 = vmax.f32 %v291, %v299
  %v308 = vmax.f32 %v292, %v300
  %v309 = vmax.f32 %v293, %v301
  %v310 = vmax.f32 %v294, %v302
  %v311 = vmax.f32 %v295, %v303
  %v312 = vmul.f32 %v304, %v304
  %v313 = vmul.f32 %v305, %v305
  %v314 = vmul.f32 %v306, %v306
  %v315 = vmul.f32 %v307, %v307
  %v316 = vmul.f32 %v308, %v308
  %v317 = vmul.f32 %v309, %v309
  %v318 = vmul.f32 %v310, %v310
  %v319 = vmul.f32 %v311, %v311
  %v320 = vsel %vm77, %v312, 0.0
  %321 = vadd.xlane.f32.xlu0 %v320
  %v322 = vpop.xlane.xlu0 %321
  %v323 = vsel %vm77, %v313, 0.0
  %324 = vadd.xlane.f32.xlu0 %v323
  %v325 = vpop.xlane.xlu0 %324
  %v326 = vsel %vm77, %v314, 0.0
  %327 = vadd.xlane.f32.xlu0 %v326
  %v328 = vpop.xlane.xlu0 %327
  %v329 = vsel %vm77, %v315, 0.0
  %330 = vadd.xlane.f32.xlu0 %v329
  %v331 = vpop.xlane.xlu0 %330
  %v332 = vsel %vm77, %v316, 0.0
  %333 = vadd.xlane.f32.xlu0 %v332
  %v334 = vpop.xlane.xlu0 %333
  %v335 = vsel %vm77, %v317, 0.0
  %336 = vadd.xlane.f32.xlu0 %v335
  %v337 = vpop.xlane.xlu0 %336
  %v338 = vsel %vm77, %v318, 0.0
  %339 = vadd.xlane.f32.xlu0 %v338
  %v340 = vpop.xlane.xlu0 %339
  %v341 = vsel %vm77, %v319, 0.0
  %342 = vadd.xlane.f32.xlu0 %v341
  %v343 = vpop.xlane.xlu0 %342
  %v344 = vmax.f32 %v322, 1e-24
  %v345 = vmax.f32 %v325, 1e-24
  %v346 = vmax.f32 %v328, 1e-24
  %v347 = vmax.f32 %v331, 1e-24
  %v348 = vmax.f32 %v334, 1e-24
  %v349 = vmax.f32 %v337, 1e-24
  %v350 = vmax.f32 %v340, 1e-24
  %v351 = vmax.f32 %v343, 1e-24
  %v352 = vrsqrt.pop %v344
  %v353 = vrsqrt.pop %v345
  %v354 = vrsqrt.pop %v346
  %v355 = vrsqrt.pop %v347
  %v356 = vrsqrt.pop %v348
  %v357 = vrsqrt.pop %v349
  %v358 = vrsqrt.pop %v350
  %v359 = vrsqrt.pop %v351
  %v360 = vmul.f32 %v304, %v352
  %v361 = vmul.f32 %v305, %v353
  %v362 = vmul.f32 %v306, %v354
  %v363 = vmul.f32 %v307, %v355
  %v364 = vmul.f32 %v308, %v356
  %v365 = vmul.f32 %v309, %v357
  %v366 = vmul.f32 %v310, %v358
  %v367 = vmul.f32 %v311, %v359
  %v368 = vpack.c.bf16 %v361, %v360
  %v369 = vpack.c.bf16 %v363, %v362
  %v370 = vpack.c.bf16 %v365, %v364
  %v371 = vpack.c.bf16 %v367, %v366
  %v372 = vld [vmem:[%s5] sm:$0xf]
  %v373 = vld [vmem:[%s5 + $0x4] sm:$0xf]
  %v374 = vld [vmem:[%s5 + $0x8] sm:$0xf]
  %v375 = vld [vmem:[%s5 + $0xc] sm:$0xf]
  %v380 = vunpack.c.l.b16 %v372
  %v381 = vunpack.c.l.b16 %v373
  %v382 = vunpack.c.l.b16 %v374
  %v383 = vunpack.c.l.b16 %v375
  %v384 = vpack.c.b16 %v381, %v380
  %v385 = vpack.c.b16 %v383, %v382
  %v389 = vsel %vm77, %v368, 0
  %v392 = vsel %vm77, %v369, 0
  %v395 = vsel %vm77, %v370, 0
  %v398 = vsel %vm77, %v371, 0
  %400 = vmatprep.subr.bf16.mxu0 0
  %401 = vmatpush1.bf16.msra.mxu0 %v384
  %402 = vmatprep.subr.bf16.mxu0 0
  %403 = vmatpush1.bf16.msra.mxu0 %v385
  %404 = vmatprep.subr.bf16.mxu0 0
  %405 = vmatpush1.bf16.msra.mxu0 0
  %406 = vmatprep.subr.bf16.mxu0 0
  %407 = vmatpush1.bf16.msra.mxu0 0
  %408 = vmatprep.subr.bf16.mxu0 0
  %409 = vmatpush1.bf16.msra.mxu0 0
  %410 = vmatprep.subr.bf16.mxu0 0
  %411 = vmatpush1.bf16.msra.mxu0 0
  %412 = vmatprep.subr.bf16.mxu0 0
  %413 = vmatpush1.bf16.msra.mxu0 0
  %414 = vmatprep.subr.bf16.mxu0 0
  %415 = vmatpush1.bf16.msra.mxu0 0
  %416 = vmatprep.subr.bf16.mxu0 0
  %417 = vmatpush1.bf16.msra.mxu0 0
  %418 = vmatprep.subr.bf16.mxu0 0
  %419 = vmatpush1.bf16.msra.mxu0 0
  %420 = vmatprep.subr.bf16.mxu0 0
  %421 = vmatpush1.bf16.msra.mxu0 0
  %422 = vmatprep.subr.bf16.mxu0 0
  %423 = vmatpush1.bf16.msra.mxu0 0
  %424 = vmatprep.subr.bf16.mxu0 0
  %425 = vmatpush1.bf16.msra.mxu0 0
  %426 = vmatprep.subr.bf16.mxu0 0
  %427 = vmatpush1.bf16.msra.mxu0 0
  %428 = vmatprep.subr.bf16.mxu0 0
  %429 = vmatpush1.bf16.msra.mxu0 0
  %430 = vmatprep.subr.bf16.mxu0 0
  %431 = vmatpush1.bf16.msra.mxu0 0
  %432 = vmatprep.mubr.bf16.mxu0 0
  %433 = vmatmul.mubr.bf16.gmra.mrb[0].mxu0 %v389
  %v434 = vpop.f32.mrb[0].mxu0
  %v435 = vadd.f32 0.0, %v434
  %v436 = vpop.f32.mrb[0].mxu0
  %v437 = vpop.f32.mrb[0].mxu0
  %v438 = vadd.f32 0.0, %v437
  %v439 = vpop.f32.mrb[0].mxu0
  %440 = vmatprep.mubr.bf16.mxu0 0
  %441 = vmatmul.mubr.bf16.gmra.mrb[0].mxu0 %v392
  %v442 = vpop.f32.mrb[0].mxu0
  %v443 = vadd.f32 0.0, %v442
  %v444 = vpop.f32.mrb[0].mxu0
  %v445 = vpop.f32.mrb[0].mxu0
  %v446 = vadd.f32 0.0, %v445
  %v447 = vpop.f32.mrb[0].mxu0
  %448 = vmatprep.mubr.bf16.mxu0 0
  %449 = vmatmul.mubr.bf16.gmra.mrb[0].mxu0 %v395
  %v450 = vpop.f32.mrb[0].mxu0
  %v451 = vadd.f32 0.0, %v450
  %v452 = vpop.f32.mrb[0].mxu0
  %v453 = vpop.f32.mrb[0].mxu0
  %v454 = vadd.f32 0.0, %v453
  %v455 = vpop.f32.mrb[0].mxu0
  %456 = vmatprep.mubr.bf16.mxu0 0
  %457 = vmatmul.mubr.bf16.gmra.mrb[0].mxu0 %v398
  %v458 = vpop.f32.mrb[0].mxu0
  %v459 = vadd.f32 0.0, %v458
  %v460 = vpop.f32.mrb[0].mxu0
  %v461 = vpop.f32.mrb[0].mxu0
  %v462 = vadd.f32 0.0, %v461
  %v463 = vpop.f32.mrb[0].mxu0
  %464 = vdwg.mxu0
  %v465 = vpack.c.bf16 %v438, %v435
  %v466 = vpack.c.bf16 %v446, %v443
  %v467 = vpack.c.bf16 %v454, %v451
  %v468 = vpack.c.bf16 %v462, %v459
  %473 = vrot.lane.b32.xlu0 %v465, 112
  %v474 = vpop.permute.xlu0 %473
  %475 = vrot.lane.b32.xlu0 %v466, 112
  %v476 = vpop.permute.xlu0 %475
  %477 = vrot.lane.b32.xlu0 %v467, 112
  %v478 = vpop.permute.xlu0 %477
  %479 = vrot.lane.b32.xlu0 %v468, 112
  %v480 = vpop.permute.xlu0 %479
  %485 = vmatprep.subr.bf16.mxu0 0
  %486 = vmatpush1.bf16.msra.mxu0 %v474
  %487 = vmatprep.subr.bf16.mxu0 0
  %488 = vmatpush1.bf16.msra.mxu0 %v476
  %489 = vmatprep.subr.bf16.mxu0 0
  %490 = vmatpush1.bf16.msra.mxu0 %v478
  %491 = vmatprep.subr.bf16.mxu0 0
  %492 = vmatpush1.bf16.msra.mxu0 %v480
  %493 = vmatprep.subr.bf16.mxu0 0
  %494 = vmatpush1.bf16.msra.mxu0 0
  %495 = vmatprep.subr.bf16.mxu0 0
  %496 = vmatpush1.bf16.msra.mxu0 0
  %497 = vmatprep.subr.bf16.mxu0 0
  %498 = vmatpush1.bf16.msra.mxu0 0
  %499 = vmatprep.subr.bf16.mxu0 0
  %500 = vmatpush1.bf16.msra.mxu0 0
  %501 = vmatprep.subr.bf16.mxu0 0
  %502 = vmatpush1.bf16.msra.mxu0 0
  %503 = vmatprep.subr.bf16.mxu0 0
  %504 = vmatpush1.bf16.msra.mxu0 0
  %505 = vmatprep.subr.bf16.mxu0 0
  %506 = vmatpush1.bf16.msra.mxu0 0
  %507 = vmatprep.subr.bf16.mxu0 0
  %508 = vmatpush1.bf16.msra.mxu0 0
  %509 = vmatprep.subr.bf16.mxu0 0
  %510 = vmatpush1.bf16.msra.mxu0 0
  %511 = vmatprep.subr.bf16.mxu0 0
  %512 = vmatpush1.bf16.msra.mxu0 0
  %513 = vmatprep.subr.bf16.mxu0 0
  %514 = vmatpush1.bf16.msra.mxu0 0
  %515 = vmatprep.subr.bf16.mxu0 0
  %516 = vmatpush1.bf16.msra.mxu0 0
  %517 = vmatprep.mubr.bf16.mxu0 0
  %518 = vmatmul.mubr.bf16.gmra.mrb[0].mxu0 %v197
  %v519 = vpop.f32.mrb[0].mxu0
  %v520 = vadd.f32 0.0, %v519
  %v521 = vpop.f32.mrb[0].mxu0
  %v522 = vpop.f32.mrb[0].mxu0
  %v523 = vadd.f32 0.0, %v522
  %v524 = vpop.f32.mrb[0].mxu0
  %525 = vmatprep.mubr.bf16.mxu0 0
  %526 = vmatmul.mubr.bf16.gmra.mrb[0].mxu0 %v200
  %v527 = vpop.f32.mrb[0].mxu0
  %v528 = vadd.f32 0.0, %v527
  %v529 = vpop.f32.mrb[0].mxu0
  %v530 = vpop.f32.mrb[0].mxu0
  %v531 = vadd.f32 0.0, %v530
  %v532 = vpop.f32.mrb[0].mxu0
  %533 = vmatprep.mubr.bf16.mxu0 0
  %534 = vmatmul.mubr.bf16.gmra.mrb[0].mxu0 %v203
  %v535 = vpop.f32.mrb[0].mxu0
  %v536 = vadd.f32 0.0, %v535
  %v537 = vpop.f32.mrb[0].mxu0
  %v538 = vpop.f32.mrb[0].mxu0
  %v539 = vadd.f32 0.0, %v538
  %v540 = vpop.f32.mrb[0].mxu0
  %541 = vmatprep.mubr.bf16.mxu0 0
  %542 = vmatmul.mubr.bf16.gmra.mrb[0].mxu0 %v206
  %v543 = vpop.f32.mrb[0].mxu0
  %v544 = vadd.f32 0.0, %v543
  %v545 = vpop.f32.mrb[0].mxu0
  %v546 = vpop.f32.mrb[0].mxu0
  %v547 = vadd.f32 0.0, %v546
  %v548 = vpop.f32.mrb[0].mxu0
  %549 = vdwg.mxu0
  %v550 = vadd.f32 %v435, %v520
  %v551 = vadd.f32 %v438, %v523
  %v552 = vadd.f32 %v443, %v528
  %v553 = vadd.f32 %v446, %v531
  %v554 = vadd.f32 %v451, %v536
  %v555 = vadd.f32 %v454, %v539
  %v556 = vadd.f32 %v459, %v544
  %v557 = vadd.f32 %v462, %v547
  %v558 = vld [vmem:[%s6] sm:$0x1]
  %v560 = vlaneseq
  %v561 = vshrl.u32 %v560, 7
  %v562 = vsub.s32 0, %v561
  %v563 = vrot.slane %v558, %v562
  %v565 = vadd.f32 %v550, %v563
  %v566 = vadd.f32 %v551, %v563
  %v567 = vadd.f32 %v552, %v563
  %v568 = vadd.f32 %v553, %v563
  %v569 = vadd.f32 %v554, %v563
  %v570 = vadd.f32 %v555, %v563
  %v571 = vadd.f32 %v556, %v563
  %v572 = vadd.f32 %v557, %v563
  %v573 = vmul.f32 %v565, 0.2
  %v574 = vmul.f32 %v566, 0.2
  %v575 = vmul.f32 %v567, 0.2
  %v576 = vmul.f32 %v568, 0.2
  %v577 = vmul.f32 %v569, 0.2
  %v578 = vmul.f32 %v570, 0.2
  %v579 = vmul.f32 %v571, 0.2
  %v580 = vmul.f32 %v572, 0.2
  %v581 = vmax.f32 %v565, %v573
  %v582 = vmax.f32 %v566, %v574
  %v583 = vmax.f32 %v567, %v575
  %v584 = vmax.f32 %v568, %v576
  %v585 = vmax.f32 %v569, %v577
  %v586 = vmax.f32 %v570, %v578
  %v587 = vmax.f32 %v571, %v579
  %v588 = vmax.f32 %v572, %v580
  %v589 = vmul.f32 %v581, %v581
  %v590 = vmul.f32 %v582, %v582
  %v591 = vmul.f32 %v583, %v583
  %v592 = vmul.f32 %v584, %v584
  %v593 = vmul.f32 %v585, %v585
  %v594 = vmul.f32 %v586, %v586
  %v595 = vmul.f32 %v587, %v587
  %v596 = vmul.f32 %v588, %v588
  %vm597 = vcmask 130048
  %v598 = vsel %vm597, %v589, 0.0
  %599 = vadd.xlane.f32.xlu0 %v598
  %v600 = vpop.xlane.xlu0 %599
  %v601 = vsel %vm597, %v590, 0.0
  %602 = vadd.xlane.f32.xlu0 %v601
  %v603 = vpop.xlane.xlu0 %602
  %v604 = vsel %vm597, %v591, 0.0
  %605 = vadd.xlane.f32.xlu0 %v604
  %v606 = vpop.xlane.xlu0 %605
  %v607 = vsel %vm597, %v592, 0.0
  %608 = vadd.xlane.f32.xlu0 %v607
  %v609 = vpop.xlane.xlu0 %608
  %v610 = vsel %vm597, %v593, 0.0
  %611 = vadd.xlane.f32.xlu0 %v610
  %v612 = vpop.xlane.xlu0 %611
  %v613 = vsel %vm597, %v594, 0.0
  %614 = vadd.xlane.f32.xlu0 %v613
  %v615 = vpop.xlane.xlu0 %614
  %v616 = vsel %vm597, %v595, 0.0
  %617 = vadd.xlane.f32.xlu0 %v616
  %v618 = vpop.xlane.xlu0 %617
  %v619 = vsel %vm597, %v596, 0.0
  %620 = vadd.xlane.f32.xlu0 %v619
  %v621 = vpop.xlane.xlu0 %620
  %v622 = vmax.f32 %v600, 1e-24
  %v623 = vmax.f32 %v603, 1e-24
  %v624 = vmax.f32 %v606, 1e-24
  %v625 = vmax.f32 %v609, 1e-24
  %v626 = vmax.f32 %v612, 1e-24
  %v627 = vmax.f32 %v615, 1e-24
  %v628 = vmax.f32 %v618, 1e-24
  %v629 = vmax.f32 %v621, 1e-24
  %v630 = vrsqrt.pop %v622
  %v631 = vrsqrt.pop %v623
  %v632 = vrsqrt.pop %v624
  %v633 = vrsqrt.pop %v625
  %v634 = vrsqrt.pop %v626
  %v635 = vrsqrt.pop %v627
  %v636 = vrsqrt.pop %v628
  %v637 = vrsqrt.pop %v629
  %v638 = vmul.f32 %v581, %v630
  %v639 = vmul.f32 %v582, %v631
  %v640 = vmul.f32 %v583, %v632
  %v641 = vmul.f32 %v584, %v633
  %v642 = vmul.f32 %v585, %v634
  %v643 = vmul.f32 %v586, %v635
  %v644 = vmul.f32 %v587, %v636
  %v645 = vmul.f32 %v588, %v637
  %654 = vrot.lane.b32.xlu0 %v360, 32
  %v655 = vpop.permute.xlu0 %654
  %656 = vrot.lane.b32.xlu0 %v361, 32
  %v657 = vpop.permute.xlu0 %656
  %658 = vrot.lane.b32.xlu0 %v362, 32
  %v659 = vpop.permute.xlu0 %658
  %660 = vrot.lane.b32.xlu0 %v363, 32
  %v661 = vpop.permute.xlu0 %660
  %662 = vrot.lane.b32.xlu0 %v364, 32
  %v663 = vpop.permute.xlu0 %662
  %664 = vrot.lane.b32.xlu0 %v365, 32
  %v665 = vpop.permute.xlu0 %664
  %666 = vrot.lane.b32.xlu0 %v366, 32
  %v667 = vpop.permute.xlu0 %666
  %668 = vrot.lane.b32.xlu0 %v367, 32
  %v669 = vpop.permute.xlu0 %668
  %686 = vrot.lane.b32.xlu0 %v638, 64
  %v687 = vpop.permute.xlu0 %686
  %688 = vrot.lane.b32.xlu0 %v639, 64
  %v689 = vpop.permute.xlu0 %688
  %690 = vrot.lane.b32.xlu0 %v640, 64
  %v691 = vpop.permute.xlu0 %690
  %692 = vrot.lane.b32.xlu0 %v641, 64
  %v693 = vpop.permute.xlu0 %692
  %694 = vrot.lane.b32.xlu0 %v642, 64
  %v695 = vpop.permute.xlu0 %694
  %696 = vrot.lane.b32.xlu0 %v643, 64
  %v697 = vpop.permute.xlu0 %696
  %698 = vrot.lane.b32.xlu0 %v644, 64
  %v699 = vpop.permute.xlu0 %698
  %700 = vrot.lane.b32.xlu0 %v645, 64
  %v701 = vpop.permute.xlu0 %700
  %v710 = vsel %vm77, %v49, %v655
  %v711 = vsel %vm77, %v50, %v657
  %v712 = vsel %vm77, %v51, %v659
  %v713 = vsel %vm77, %v52, %v661
  %v714 = vsel %vm77, %v53, %v663
  %v715 = vsel %vm77, %v54, %v665
  %v716 = vsel %vm77, %v55, %v667
  %v717 = vsel %vm77, %v56, %v669
  %v718 = vsel %vm195, %v710, %v687
  %v719 = vsel %vm195, %v711, %v689
  %v720 = vsel %vm195, %v712, %v691
  %v721 = vsel %vm195, %v713, %v693
  %v722 = vsel %vm195, %v714, %v695
  %v723 = vsel %vm195, %v715, %v697
  %v724 = vsel %vm195, %v716, %v699
  %v725 = vsel %vm195, %v717, %v701
  %vm726 = vcmask 654336
  %v727 = vsel %vm726, %v718, 0.0
  %v728 = vsel %vm726, %v719, 0.0
  %v729 = vsel %vm726, %v720, 0.0
  %v730 = vsel %vm726, %v721, 0.0
  %v731 = vsel %vm726, %v722, 0.0
  %v732 = vsel %vm726, %v723, 0.0
  %v733 = vsel %vm726, %v724, 0.0
  %v734 = vsel %vm726, %v725, 0.0
  %735 = vst [vmem:[%s11] sm:$0xff] %v727
  %736 = vst [vmem:[%s11 + $0x8] sm:$0xff] %v728
  %737 = vst [vmem:[%s11 + $0x10] sm:$0xff] %v729
  %738 = vst [vmem:[%s11 + $0x18] sm:$0xff] %v730
  %739 = vst [vmem:[%s11 + $0x20] sm:$0xff] %v731
  %740 = vst [vmem:[%s11 + $0x28] sm:$0xff] %v732
  %741 = vst [vmem:[%s11 + $0x30] sm:$0xff] %v733
  %742 = vst [vmem:[%s11 + $0x38] sm:$0xff] %v734
  %v743 = vld [vmem:[%s2] sm:$0xff]
  %v744 = vld [vmem:[%s2 + $0x8] sm:$0xff]
  %v745 = vld [vmem:[%s2 + $0x10] sm:$0xff]
  %v746 = vld [vmem:[%s2 + $0x18] sm:$0xff]
  %v747 = vld [vmem:[%s2 + $0x20] sm:$0xff]
  %v748 = vld [vmem:[%s2 + $0x28] sm:$0xff]
  %v749 = vld [vmem:[%s2 + $0x30] sm:$0xff]
  %v750 = vld [vmem:[%s2 + $0x38] sm:$0xff]
  %v751 = vpack.c.bf16 %v744, %v743
  %v752 = vpack.c.bf16 %v746, %v745
  %v753 = vpack.c.bf16 %v748, %v747
  %v754 = vpack.c.bf16 %v750, %v749
  %v755 = vld [vmem:[%s7] sm:$0xf]
  %v756 = vld [vmem:[%s7 + $0x4] sm:$0xf]
  %v757 = vld [vmem:[%s7 + $0x8] sm:$0xf]
  %v758 = vld [vmem:[%s7 + $0xc] sm:$0xf]
  %v759 = vld [vmem:[%s8] sm:$0x1]
  %v761 = vlaneseq
  %v762 = vshrl.u32 %v761, 7
  %v763 = vsub.s32 0, %v762
  %v764 = vrot.slane %v759, %v763
  %v770 = vunpack.c.l.b16 %v755
  %v771 = vunpack.c.l.b16 %v756
  %v772 = vunpack.c.l.b16 %v757
  %v773 = vunpack.c.l.b16 %v758
  %v774 = vpack.c.b16 %v771, %v770
  %v775 = vpack.c.b16 %v773, %v772
  %v779 = vsel %vm77, %v751, 0
  %v782 = vsel %vm77, %v752, 0
  %v785 = vsel %vm77, %v753, 0
  %v788 = vsel %vm77, %v754, 0
  %790 = vmatprep.subr.bf16.mxu0 0
  %791 = vmatpush1.bf16.msra.mxu0 %v774
  %792 = vmatprep.subr.bf16.mxu0 0
  %793 = vmatpush1.bf16.msra.mxu0 %v775
  %794 = vmatprep.subr.bf16.mxu0 0
  %795 = vmatpush1.bf16.msra.mxu0 0
  %796 = vmatprep.subr.bf16.mxu0 0
  %797 = vmatpush1.bf16.msra.mxu0 0
  %798 = vmatprep.subr.bf16.mxu0 0
  %799 = vmatpush1.bf16.msra.mxu0 0
  %800 = vmatprep.subr.bf16.mxu0 0
  %801 = vmatpush1.bf16.msra.mxu0 0
  %802 = vmatprep.subr.bf16.mxu0 0
  %803 = vmatpush1.bf16.msra.mxu0 0
  %804 = vmatprep.subr.bf16.mxu0 0
  %805 = vmatpush1.bf16.msra.mxu0 0
  %806 = vmatprep.subr.bf16.mxu0 0
  %807 = vmatpush1.bf16.msra.mxu0 0
  %808 = vmatprep.subr.bf16.mxu0 0
  %809 = vmatpush1.bf16.msra.mxu0 0
  %810 = vmatprep.subr.bf16.mxu0 0
  %811 = vmatpush1.bf16.msra.mxu0 0
  %812 = vmatprep.subr.bf16.mxu0 0
  %813 = vmatpush1.bf16.msra.mxu0 0
  %814 = vmatprep.subr.bf16.mxu0 0
  %815 = vmatpush1.bf16.msra.mxu0 0
  %816 = vmatprep.subr.bf16.mxu0 0
  %817 = vmatpush1.bf16.msra.mxu0 0
  %818 = vmatprep.subr.bf16.mxu0 0
  %819 = vmatpush1.bf16.msra.mxu0 0
  %820 = vmatprep.subr.bf16.mxu0 0
  %821 = vmatpush1.bf16.msra.mxu0 0
  %822 = vmatprep.mubr.bf16.mxu0 0
  %823 = vmatmul.mubr.bf16.gmra.mrb[0].mxu0 %v779
  %v824 = vpop.f32.mrb[0].mxu0
  %v825 = vadd.f32 %v764, %v824
  %v826 = vpop.f32.mrb[0].mxu0
  %v827 = vpop.f32.mrb[0].mxu0
  %v828 = vadd.f32 %v764, %v827
  %v829 = vpop.f32.mrb[0].mxu0
  %830 = vmatprep.mubr.bf16.mxu0 0
  %831 = vmatmul.mubr.bf16.gmra.mrb[0].mxu0 %v782
  %v832 = vpop.f32.mrb[0].mxu0
  %v833 = vadd.f32 %v764, %v832
  %v834 = vpop.f32.mrb[0].mxu0
  %v835 = vpop.f32.mrb[0].mxu0
  %v836 = vadd.f32 %v764, %v835
  %v837 = vpop.f32.mrb[0].mxu0
  %838 = vmatprep.mubr.bf16.mxu0 0
  %839 = vmatmul.mubr.bf16.gmra.mrb[0].mxu0 %v785
  %v840 = vpop.f32.mrb[0].mxu0
  %v841 = vadd.f32 %v764, %v840
  %v842 = vpop.f32.mrb[0].mxu0
  %v843 = vpop.f32.mrb[0].mxu0
  %v844 = vadd.f32 %v764, %v843
  %v845 = vpop.f32.mrb[0].mxu0
  %846 = vmatprep.mubr.bf16.mxu0 0
  %847 = vmatmul.mubr.bf16.gmra.mrb[0].mxu0 %v788
  %v848 = vpop.f32.mrb[0].mxu0
  %v849 = vadd.f32 %v764, %v848
  %v850 = vpop.f32.mrb[0].mxu0
  %v851 = vpop.f32.mrb[0].mxu0
  %v852 = vadd.f32 %v764, %v851
  %v853 = vpop.f32.mrb[0].mxu0
  %854 = vdwg.mxu0
  %v855 = vmul.f32 %v825, 0.2
  %v856 = vmul.f32 %v828, 0.2
  %v857 = vmul.f32 %v833, 0.2
  %v858 = vmul.f32 %v836, 0.2
  %v859 = vmul.f32 %v841, 0.2
  %v860 = vmul.f32 %v844, 0.2
  %v861 = vmul.f32 %v849, 0.2
  %v862 = vmul.f32 %v852, 0.2
  %v863 = vmax.f32 %v825, %v855
  %v864 = vmax.f32 %v828, %v856
  %v865 = vmax.f32 %v833, %v857
  %v866 = vmax.f32 %v836, %v858
  %v867 = vmax.f32 %v841, %v859
  %v868 = vmax.f32 %v844, %v860
  %v869 = vmax.f32 %v849, %v861
  %v870 = vmax.f32 %v852, %v862
  %v871 = vmul.f32 %v863, %v863
  %v872 = vmul.f32 %v864, %v864
  %v873 = vmul.f32 %v865, %v865
  %v874 = vmul.f32 %v866, %v866
  %v875 = vmul.f32 %v867, %v867
  %v876 = vmul.f32 %v868, %v868
  %v877 = vmul.f32 %v869, %v869
  %v878 = vmul.f32 %v870, %v870
  %v879 = vsel %vm77, %v871, 0.0
  %880 = vadd.xlane.f32.xlu0 %v879
  %v881 = vpop.xlane.xlu0 %880
  %v882 = vsel %vm77, %v872, 0.0
  %883 = vadd.xlane.f32.xlu0 %v882
  %v884 = vpop.xlane.xlu0 %883
  %v885 = vsel %vm77, %v873, 0.0
  %886 = vadd.xlane.f32.xlu0 %v885
  %v887 = vpop.xlane.xlu0 %886
  %v888 = vsel %vm77, %v874, 0.0
  %889 = vadd.xlane.f32.xlu0 %v888
  %v890 = vpop.xlane.xlu0 %889
  %v891 = vsel %vm77, %v875, 0.0
  %892 = vadd.xlane.f32.xlu0 %v891
  %v893 = vpop.xlane.xlu0 %892
  %v894 = vsel %vm77, %v876, 0.0
  %895 = vadd.xlane.f32.xlu0 %v894
  %v896 = vpop.xlane.xlu0 %895
  %v897 = vsel %vm77, %v877, 0.0
  %898 = vadd.xlane.f32.xlu0 %v897
  %v899 = vpop.xlane.xlu0 %898
  %v900 = vsel %vm77, %v878, 0.0
  %901 = vadd.xlane.f32.xlu0 %v900
  %v902 = vpop.xlane.xlu0 %901
  %v903 = vmax.f32 %v881, 1e-24
  %v904 = vmax.f32 %v884, 1e-24
  %v905 = vmax.f32 %v887, 1e-24
  %v906 = vmax.f32 %v890, 1e-24
  %v907 = vmax.f32 %v893, 1e-24
  %v908 = vmax.f32 %v896, 1e-24
  %v909 = vmax.f32 %v899, 1e-24
  %v910 = vmax.f32 %v902, 1e-24
  %v911 = vrsqrt.pop %v903
  %v912 = vrsqrt.pop %v904
  %v913 = vrsqrt.pop %v905
  %v914 = vrsqrt.pop %v906
  %v915 = vrsqrt.pop %v907
  %v916 = vrsqrt.pop %v908
  %v917 = vrsqrt.pop %v909
  %v918 = vrsqrt.pop %v910
  %v919 = vmul.f32 %v863, %v911
  %v920 = vmul.f32 %v864, %v912
  %v921 = vmul.f32 %v865, %v913
  %v922 = vmul.f32 %v866, %v914
  %v923 = vmul.f32 %v867, %v915
  %v924 = vmul.f32 %v868, %v916
  %v925 = vmul.f32 %v869, %v917
  %v926 = vmul.f32 %v870, %v918
  %v927 = vpack.c.bf16 %v920, %v919
  %v928 = vpack.c.bf16 %v922, %v921
  %v929 = vpack.c.bf16 %v924, %v923
  %v930 = vpack.c.bf16 %v926, %v925
  %v931 = vld [vmem:[%s9] sm:$0xf]
  %v932 = vld [vmem:[%s9 + $0x4] sm:$0xf]
  %v933 = vld [vmem:[%s9 + $0x8] sm:$0xf]
  %v934 = vld [vmem:[%s9 + $0xc] sm:$0xf]
  %v935 = vld [vmem:[%s10] sm:$0x1]
  %v937 = vlaneseq
  %v938 = vshrl.u32 %v937, 7
  %v939 = vsub.s32 0, %v938
  %v940 = vrot.slane %v935, %v939
  %v946 = vunpack.c.l.b16 %v931
  %v947 = vunpack.c.l.b16 %v932
  %v948 = vunpack.c.l.b16 %v933
  %v949 = vunpack.c.l.b16 %v934
  %v950 = vpack.c.b16 %v947, %v946
  %v951 = vpack.c.b16 %v949, %v948
  %v955 = vsel %vm77, %v927, 0
  %v958 = vsel %vm77, %v928, 0
  %v961 = vsel %vm77, %v929, 0
  %v964 = vsel %vm77, %v930, 0
  %966 = vmatprep.subr.bf16.mxu0 0
  %967 = vmatpush1.bf16.msra.mxu0 %v950
  %968 = vmatprep.subr.bf16.mxu0 0
  %969 = vmatpush1.bf16.msra.mxu0 %v951
  %970 = vmatprep.subr.bf16.mxu0 0
  %971 = vmatpush1.bf16.msra.mxu0 0
  %972 = vmatprep.subr.bf16.mxu0 0
  %973 = vmatpush1.bf16.msra.mxu0 0
  %974 = vmatprep.subr.bf16.mxu0 0
  %975 = vmatpush1.bf16.msra.mxu0 0
  %976 = vmatprep.subr.bf16.mxu0 0
  %977 = vmatpush1.bf16.msra.mxu0 0
  %978 = vmatprep.subr.bf16.mxu0 0
  %979 = vmatpush1.bf16.msra.mxu0 0
  %980 = vmatprep.subr.bf16.mxu0 0
  %981 = vmatpush1.bf16.msra.mxu0 0
  %982 = vmatprep.subr.bf16.mxu0 0
  %983 = vmatpush1.bf16.msra.mxu0 0
  %984 = vmatprep.subr.bf16.mxu0 0
  %985 = vmatpush1.bf16.msra.mxu0 0
  %986 = vmatprep.subr.bf16.mxu0 0
  %987 = vmatpush1.bf16.msra.mxu0 0
  %988 = vmatprep.subr.bf16.mxu0 0
  %989 = vmatpush1.bf16.msra.mxu0 0
  %990 = vmatprep.subr.bf16.mxu0 0
  %991 = vmatpush1.bf16.msra.mxu0 0
  %992 = vmatprep.subr.bf16.mxu0 0
  %993 = vmatpush1.bf16.msra.mxu0 0
  %994 = vmatprep.subr.bf16.mxu0 0
  %995 = vmatpush1.bf16.msra.mxu0 0
  %996 = vmatprep.subr.bf16.mxu0 0
  %997 = vmatpush1.bf16.msra.mxu0 0
  %998 = vmatprep.mubr.bf16.mxu0 0
  %999 = vmatmul.mubr.bf16.gmra.mrb[0].mxu0 %v955
  %v1000 = vpop.f32.mrb[0].mxu0
  %v1001 = vadd.f32 %v940, %v1000
  %v1002 = vpop.f32.mrb[0].mxu0
  %v1003 = vpop.f32.mrb[0].mxu0
  %v1004 = vadd.f32 %v940, %v1003
  %v1005 = vpop.f32.mrb[0].mxu0
  %1006 = vmatprep.mubr.bf16.mxu0 0
  %1007 = vmatmul.mubr.bf16.gmra.mrb[0].mxu0 %v958
  %v1008 = vpop.f32.mrb[0].mxu0
  %v1009 = vadd.f32 %v940, %v1008
  %v1010 = vpop.f32.mrb[0].mxu0
  %v1011 = vpop.f32.mrb[0].mxu0
  %v1012 = vadd.f32 %v940, %v1011
  %v1013 = vpop.f32.mrb[0].mxu0
  %1014 = vmatprep.mubr.bf16.mxu0 0
  %1015 = vmatmul.mubr.bf16.gmra.mrb[0].mxu0 %v961
  %v1016 = vpop.f32.mrb[0].mxu0
  %v1017 = vadd.f32 %v940, %v1016
  %v1018 = vpop.f32.mrb[0].mxu0
  %v1019 = vpop.f32.mrb[0].mxu0
  %v1020 = vadd.f32 %v940, %v1019
  %v1021 = vpop.f32.mrb[0].mxu0
  %1022 = vmatprep.mubr.bf16.mxu0 0
  %1023 = vmatmul.mubr.bf16.gmra.mrb[0].mxu0 %v964
  %v1024 = vpop.f32.mrb[0].mxu0
  %v1025 = vadd.f32 %v940, %v1024
  %v1026 = vpop.f32.mrb[0].mxu0
  %v1027 = vpop.f32.mrb[0].mxu0
  %v1028 = vadd.f32 %v940, %v1027
  %v1029 = vpop.f32.mrb[0].mxu0
  %1030 = vdwg.mxu0
  %v1031 = vmul.f32 %v1001, 0.2
  %v1032 = vmul.f32 %v1004, 0.2
  %v1033 = vmul.f32 %v1009, 0.2
  %v1034 = vmul.f32 %v1012, 0.2
  %v1035 = vmul.f32 %v1017, 0.2
  %v1036 = vmul.f32 %v1020, 0.2
  %v1037 = vmul.f32 %v1025, 0.2
  %v1038 = vmul.f32 %v1028, 0.2
  %v1039 = vmax.f32 %v1001, %v1031
  %v1040 = vmax.f32 %v1004, %v1032
  %v1041 = vmax.f32 %v1009, %v1033
  %v1042 = vmax.f32 %v1012, %v1034
  %v1043 = vmax.f32 %v1017, %v1035
  %v1044 = vmax.f32 %v1020, %v1036
  %v1045 = vmax.f32 %v1025, %v1037
  %v1046 = vmax.f32 %v1028, %v1038
  %v1047 = vmul.f32 %v1039, %v1039
  %v1048 = vmul.f32 %v1040, %v1040
  %v1049 = vmul.f32 %v1041, %v1041
  %v1050 = vmul.f32 %v1042, %v1042
  %v1051 = vmul.f32 %v1043, %v1043
  %v1052 = vmul.f32 %v1044, %v1044
  %v1053 = vmul.f32 %v1045, %v1045
  %v1054 = vmul.f32 %v1046, %v1046
  %v1055 = vsel %vm597, %v1047, 0.0
  %1056 = vadd.xlane.f32.xlu0 %v1055
  %v1057 = vpop.xlane.xlu0 %1056
  %v1058 = vsel %vm597, %v1048, 0.0
  %1059 = vadd.xlane.f32.xlu0 %v1058
  %v1060 = vpop.xlane.xlu0 %1059
  %v1061 = vsel %vm597, %v1049, 0.0
  %1062 = vadd.xlane.f32.xlu0 %v1061
  %v1063 = vpop.xlane.xlu0 %1062
  %v1064 = vsel %vm597, %v1050, 0.0
  %1065 = vadd.xlane.f32.xlu0 %v1064
  %v1066 = vpop.xlane.xlu0 %1065
  %v1067 = vsel %vm597, %v1051, 0.0
  %1068 = vadd.xlane.f32.xlu0 %v1067
  %v1069 = vpop.xlane.xlu0 %1068
  %v1070 = vsel %vm597, %v1052, 0.0
  %1071 = vadd.xlane.f32.xlu0 %v1070
  %v1072 = vpop.xlane.xlu0 %1071
  %v1073 = vsel %vm597, %v1053, 0.0
  %1074 = vadd.xlane.f32.xlu0 %v1073
  %v1075 = vpop.xlane.xlu0 %1074
  %v1076 = vsel %vm597, %v1054, 0.0
  %1077 = vadd.xlane.f32.xlu0 %v1076
  %v1078 = vpop.xlane.xlu0 %1077
  %v1079 = vmax.f32 %v1057, 1e-24
  %v1080 = vmax.f32 %v1060, 1e-24
  %v1081 = vmax.f32 %v1063, 1e-24
  %v1082 = vmax.f32 %v1066, 1e-24
  %v1083 = vmax.f32 %v1069, 1e-24
  %v1084 = vmax.f32 %v1072, 1e-24
  %v1085 = vmax.f32 %v1075, 1e-24
  %v1086 = vmax.f32 %v1078, 1e-24
  %v1087 = vrsqrt.pop %v1079
  %v1088 = vrsqrt.pop %v1080
  %v1089 = vrsqrt.pop %v1081
  %v1090 = vrsqrt.pop %v1082
  %v1091 = vrsqrt.pop %v1083
  %v1092 = vrsqrt.pop %v1084
  %v1093 = vrsqrt.pop %v1085
  %v1094 = vrsqrt.pop %v1086
  %v1095 = vmul.f32 %v1039, %v1087
  %v1096 = vmul.f32 %v1040, %v1088
  %v1097 = vmul.f32 %v1041, %v1089
  %v1098 = vmul.f32 %v1042, %v1090
  %v1099 = vmul.f32 %v1043, %v1091
  %v1100 = vmul.f32 %v1044, %v1092
  %v1101 = vmul.f32 %v1045, %v1093
  %v1102 = vmul.f32 %v1046, %v1094
  %1111 = vrot.lane.b32.xlu0 %v919, 32
  %v1112 = vpop.permute.xlu0 %1111
  %1113 = vrot.lane.b32.xlu0 %v920, 32
  %v1114 = vpop.permute.xlu0 %1113
  %1115 = vrot.lane.b32.xlu0 %v921, 32
  %v1116 = vpop.permute.xlu0 %1115
  %1117 = vrot.lane.b32.xlu0 %v922, 32
  %v1118 = vpop.permute.xlu0 %1117
  %1119 = vrot.lane.b32.xlu0 %v923, 32
  %v1120 = vpop.permute.xlu0 %1119
  %1121 = vrot.lane.b32.xlu0 %v924, 32
  %v1122 = vpop.permute.xlu0 %1121
  %1123 = vrot.lane.b32.xlu0 %v925, 32
  %v1124 = vpop.permute.xlu0 %1123
  %1125 = vrot.lane.b32.xlu0 %v926, 32
  %v1126 = vpop.permute.xlu0 %1125
  %1143 = vrot.lane.b32.xlu0 %v1095, 64
  %v1144 = vpop.permute.xlu0 %1143
  %1145 = vrot.lane.b32.xlu0 %v1096, 64
  %v1146 = vpop.permute.xlu0 %1145
  %1147 = vrot.lane.b32.xlu0 %v1097, 64
  %v1148 = vpop.permute.xlu0 %1147
  %1149 = vrot.lane.b32.xlu0 %v1098, 64
  %v1150 = vpop.permute.xlu0 %1149
  %1151 = vrot.lane.b32.xlu0 %v1099, 64
  %v1152 = vpop.permute.xlu0 %1151
  %1153 = vrot.lane.b32.xlu0 %v1100, 64
  %v1154 = vpop.permute.xlu0 %1153
  %1155 = vrot.lane.b32.xlu0 %v1101, 64
  %v1156 = vpop.permute.xlu0 %1155
  %1157 = vrot.lane.b32.xlu0 %v1102, 64
  %v1158 = vpop.permute.xlu0 %1157
  %v1167 = vsel %vm77, %v743, %v1112
  %v1168 = vsel %vm77, %v744, %v1114
  %v1169 = vsel %vm77, %v745, %v1116
  %v1170 = vsel %vm77, %v746, %v1118
  %v1171 = vsel %vm77, %v747, %v1120
  %v1172 = vsel %vm77, %v748, %v1122
  %v1173 = vsel %vm77, %v749, %v1124
  %v1174 = vsel %vm77, %v750, %v1126
  %v1175 = vsel %vm195, %v1167, %v1144
  %v1176 = vsel %vm195, %v1168, %v1146
  %v1177 = vsel %vm195, %v1169, %v1148
  %v1178 = vsel %vm195, %v1170, %v1150
  %v1179 = vsel %vm195, %v1171, %v1152
  %v1180 = vsel %vm195, %v1172, %v1154
  %v1181 = vsel %vm195, %v1173, %v1156
  %v1182 = vsel %vm195, %v1174, %v1158
  %v1183 = vsel %vm726, %v1175, 0.0
  %v1184 = vsel %vm726, %v1176, 0.0
  %v1185 = vsel %vm726, %v1177, 0.0
  %v1186 = vsel %vm726, %v1178, 0.0
  %v1187 = vsel %vm726, %v1179, 0.0
  %v1188 = vsel %vm726, %v1180, 0.0
  %v1189 = vsel %vm726, %v1181, 0.0
  %v1190 = vsel %vm726, %v1182, 0.0
  %1191 = vst [vmem:[%s12] sm:$0xff] %v1183
  %1192 = vst [vmem:[%s12 + $0x8] sm:$0xff] %v1184
  %1193 = vst [vmem:[%s12 + $0x10] sm:$0xff] %v1185
  %1194 = vst [vmem:[%s12 + $0x18] sm:$0xff] %v1186
  %1195 = vst [vmem:[%s12 + $0x20] sm:$0xff] %v1187
  %1196 = vst [vmem:[%s12 + $0x28] sm:$0xff] %v1188
  %1197 = vst [vmem:[%s12 + $0x30] sm:$0xff] %v1189
  %1198 = vst [vmem:[%s12 + $0x38] sm:$0xff] %v1190
  // Predicated region
  $region46: #{two_side_graph_forward.1} parent=0 // pred_check
    _
  $region47: #{two_side_graph_forward.1} parent=0 // pred_check_branch
    %1200 = sbr.rel (0) target = $region49
  $region48: #{two_side_graph_forward.1} parent=0 // pred_region
    _
  $region49: #{two_side_graph_forward.1} parent=0 // pred_fallthru
    _
  // Predicated region
  $region50: #{two_side_graph_forward.1} parent=0 // pred_check
    _
  $region51: #{two_side_graph_forward.1} parent=0 // pred_check_branch
    %1202 = sbr.rel (0) target = $region53
  $region52: #{two_side_graph_forward.1} parent=0 // pred_region
    _
  $region53: #{two_side_graph_forward.1} parent=0 // pred_fallthru
    _
  // Predicated region
  $region54: #{two_side_graph_forward.1} parent=0 // pred_check
    _
  $region55: #{two_side_graph_forward.1} parent=0 // pred_check_branch
    %1204 = sbr.rel (0) target = $region57
  $region56: #{two_side_graph_forward.1} parent=0 // pred_region
    _
  $region57: #{two_side_graph_forward.1} parent=0 // pred_fallthru
    _
  // Predicated region
  $region58: #{two_side_graph_forward.1} parent=0 // pred_check
    _
  $region59: #{two_side_graph_forward.1} parent=0 // pred_check_branch
    %1206 = sbr.rel (0) target = $region61
  $region60: #{two_side_graph_forward.1} parent=0 // pred_region
    _
  $region61: #{two_side_graph_forward.1} parent=0 // pred_fallthru
    _

</llo_original>
